<compile_context>
chip_gen: v7x
topology: tpu7x:2x2x1
jax: 0.10.0
libtpu: 0.0.40
codegen_flags: <defaults>
</compile_context>

<pallas_src>
import functools

import jax
import jax.numpy as jnp
from jax.experimental import pallas as pl
from jax.experimental.pallas import tpu as pltpu

GROUPSIZE = 64
# TODO(synk): the original module uses torch.half (fp16); bf16 is the TPU-native
# MXU/VPU input type, so activations / scales / outputs use bfloat16 here.
DTYPE = jnp.bfloat16


def _round_up(x, m):
    return (x + m - 1) // m * m


def _pick_divisor(n, candidates):
    for c in candidates:
        if n % c == 0:
            return c
    return n


def _dequant_matmul_kernel(a_ref, wq_ref, s_ref, o_ref, acc_ref):
    """One (tm, tn) output tile, accumulated over the K grid axis.

    a_ref  : (tm, tk)              bf16 activation tile
    wq_ref : (tk, tn)              int8 pre-biased codes (q - 4) in [-4, 3]
    s_ref  : (tk // GROUPSIZE, tn) bf16 group scales (squeezed)
    o_ref  : (tm, tn)              bf16 output tile
    acc_ref: (tm, tn)              f32 accumulator scratch
    """
    k_step = pl.program_id(2)

    @pl.when(k_step == 0)
    def _():
        acc_ref[...] = jnp.zeros_like(acc_ref)

    tk, tn = wq_ref.shape
    gk = s_ref.shape[0]  # number of quantization groups in this K tile

    # Dequantize in bf16 (native VALU width on v6e/v7x).  Codes are stored already
    # biased by -4, so this is just convert + per-group scale:
    #   w[i, j] = wq[i, j] * s[i // 64, j]        (wq == q - 4)
    q = wq_ref[...].astype(jnp.bfloat16)                                  # (tk, tn)
    s = s_ref[...]                                                        # (gk, tn)
    w = (q.reshape(gk, GROUPSIZE, tn) * s[:, None, :]).reshape(tk, tn)

    # bf16 x bf16 -> f32 accumulate is the native MXU path.
    acc_ref[...] += jnp.dot(a_ref[...], w, preferred_element_type=jnp.float32)

    @pl.when(k_step == pl.num_programs(2) - 1)
    def _():
        o_ref[...] = acc_ref[...].astype(o_ref.dtype)


@functools.partial(jax.jit, static_argnames=("tm_max",))
def marlin_3bit_matmul(a2d, wq_blocked, s_blocked, *, tm_max=256):
    """C = A @ dequant(wq, s).

    a2d:        (M, K)                    bf16 activations
    wq_blocked: (N//tn, K, tn)            int8 pre-biased codes, pre-blocked column tiles
    s_blocked:  (N//tn, K//GROUPSIZE, tn) bf16 group scales, same blocking
    """
    M, K = a2d.shape
    nb, Kw, tn = wq_blocked.shape
    N = nb * tn
    assert Kw == K and s_blocked.shape == (nb, K // GROUPSIZE, tn)

    # M tile: multiple of 16 (bf16 min sublane tile), capped at tm_max; pad M if needed.
    tm = min(tm_max, _round_up(M, 16))
    m_pad = _round_up(M, tm)
    if m_pad != M:
        a2d = jnp.pad(a2d, ((0, m_pad - M), (0, 0)))

    # K tile: a multiple of 512 (keeps the scales block >= 8 sublanes) or the full K.
    tk = _pick_divisor(K, (2048, 1024, 512))

    # N outermost so the (tk, tn) weight tile stays resident across M tiles when
    # K fits a single K tile; K innermost for the accumulator pattern.
    grid = (nb, m_pad // tm, K // tk)

    out = pl.pallas_call(
        _dequant_matmul_kernel,
        out_shape=jax.ShapeDtypeStruct((m_pad, N), DTYPE),
        grid_spec=pltpu.PrefetchScalarGridSpec(
            num_scalar_prefetch=0,
            grid=grid,
            in_specs=[
                pl.BlockSpec((tm, tk), lambda j, i, k: (i, k)),                       # A
                pl.BlockSpec((None, tk, tn), lambda j, i, k: (j, k, 0)),              # wq
                pl.BlockSpec((None, tk // GROUPSIZE, tn), lambda j, i, k: (j, k, 0)), # s
            ],
            out_specs=pl.BlockSpec((tm, tn), lambda j, i, k: (i, j)),
            scratch_shapes=[pltpu.VMEM((tm, tn), jnp.float32)],
        ),
        compiler_params=pltpu.CompilerParams(
            dimension_semantics=("parallel", "parallel", "arbitrary"),
            vmem_limit_bytes=32 * 1024 * 1024,
        ),
        cost_estimate=pl.CostEstimate(
            flops=2 * m_pad * N * K,
            transcendentals=0,
            bytes_accessed=(a2d.size * 2 + wq_blocked.size
                            + s_blocked.size * 2 + m_pad * N * 2),
        ),
    )(a2d, wq_blocked, s_blocked)

    return out[:M] if m_pad != M else out


class Layer3bitFaster:
    """JAX/Pallas port of the Marlin 3-bit (symmetric, grouped) linear layer (no bias)."""

    def __init__(self, infeatures, outfeatures, groupsize=64, *, key=None):
        if groupsize != 64:
            raise ValueError("Only groupsize 64 is supported.")
        if infeatures % 64 != 0 or outfeatures % 64 != 0 or (
                infeatures % 256 != 0 and outfeatures % 256 != 0):
            raise ValueError(
                "(64|infeatures & 256|outfeatures) or (256|infeatures & 64|outfeatures)")
        if infeatures % groupsize != 0:
            raise ValueError("`infeatures` must be divisible by `groupsize`.")
        self.k = infeatures
        self.n = outfeatures
        self.groupsize = groupsize

        # N tile used for the pre-blocked weight layout (contiguous HBM slab per tile).
        self.tn = _pick_divisor(self.n, (512, 256, 128))
        nb = self.n // self.tn

        if key is None:
            key = jax.random.PRNGKey(0)
        k_w, k_s = jax.random.split(key)
        # Deterministic synthetic quantized weights (3-bit codes 0..7) and group scales,
        # standing in for the Marlin-packed B1/B2/s buffers.
        q = jax.random.randint(k_w, (self.k, self.n), 0, 8, dtype=jnp.int32)
        s = jax.random.uniform(
            k_s, (self.k // groupsize, self.n), minval=0.01, maxval=0.1,
            dtype=jnp.float32).astype(DTYPE)
        # Pre-bias the codes (q - 4 in [-4, 3]) so the kernel dequant is convert + mul only.
        wq = (q - 4).astype(jnp.int8)
        # Pre-block to (N//tn, K, tn) / (N//tn, K//g, tn).
        self.wq = jnp.transpose(wq.reshape(self.k, nb, self.tn), (1, 0, 2))
        self.s = jnp.transpose(s.reshape(self.k // groupsize, nb, self.tn), (1, 0, 2))

    def unblocked_weights(self):
        """(K, N) unbiased codes in [0, 7] and (K//g, N) scales, for reference checks."""
        wq = (jnp.transpose(self.wq, (1, 0, 2)).reshape(self.k, self.n)
              .astype(jnp.int32) + 4).astype(jnp.int8)
        s = jnp.transpose(self.s, (1, 0, 2)).reshape(self.k // self.groupsize, self.n)
        return wq, s

    def __call__(self, A):
        a2d = A.reshape((-1, A.shape[-1])).astype(DTYPE)
        c2d = marlin_3bit_matmul(a2d, self.wq, self.s)
        return c2d.reshape(A.shape[:-1] + (self.n,))


if __name__ == "__main__":
    infeatures, outfeatures = 512, 256   # k % 64 == 0 (and % 256 == 0), n % 256 == 0
    batch_shape = (2, 8)                 # flattened M = 16

    layer = Layer3bitFaster(infeatures, outfeatures, key=jax.random.PRNGKey(0))

    a_key = jax.random.PRNGKey(1)
    A = jax.random.normal(a_key, batch_shape + (infeatures,), dtype=jnp.float32).astype(DTYPE)

    C = layer(A)
    C = jax.block_until_ready(C)
    assert C.shape == batch_shape + (outfeatures,)
    assert C.dtype == DTYPE

    # Pure-JAX reference of the dequant + matmul semantics (same bf16 rounding of W).
    wq_full, s_full = layer.unblocked_weights()
    w_deq = ((wq_full.astype(jnp.float32) - 4.0)
             * jnp.repeat(s_full.astype(jnp.float32), GROUPSIZE, axis=0)).astype(DTYPE)
    ref = jnp.dot(A.reshape(-1, infeatures).astype(jnp.float32),
                  w_deq.astype(jnp.float32)).astype(DTYPE)
    err = jnp.max(jnp.abs(C.reshape(-1, outfeatures).astype(jnp.float32)
                          - ref.astype(jnp.float32)))
    assert float(err) < 5e-2, f"mismatch vs reference: {float(err)}"

    print("KERNEL_OK")
</pallas_src>

<mosaic_0001>
module attributes {stable_mosaic.version = 11 : i64} {
  func.func @_dequant_matmul_kernel(%arg0: i32, %arg1: i32, %arg2: i32, %arg3: memref<16x512xbf16, #tpu.memory_space<vmem>>, %arg4: memref<1x512x256xi8, #tpu.memory_space<vmem>>, %arg5: memref<1x8x256xbf16, #tpu.memory_space<vmem>>, %arg6: memref<16x256xbf16, #tpu.memory_space<vmem>>, %arg7: memref<16x256xf32, #tpu.memory_space<vmem>>) attributes {dimension_semantics = [#tpu.dimension_semantics<parallel>, #tpu.dimension_semantics<parallel>, #tpu.dimension_semantics<arbitrary>], iteration_bounds = array<i64: 1, 1, 1>, scalar_prefetch = 0 : i64, scratch_operands = 1 : i64, tpu.core_type = #tpu.core_type<tc>, window_params = [{transform_indices = @transform_0, window_bounds = array<i64: 16, 512>}, {transform_indices = @transform_1, window_bounds = array<i64: 1, 512, 256>}, {transform_indices = @transform_2, window_bounds = array<i64: 1, 8, 256>}, {transform_indices = @transform_3, window_bounds = array<i64: 16, 256>}]} {
    %c0_i32 = arith.constant 0 : i32
    %0 = arith.cmpi eq, %arg2, %c0_i32 : i32
    %1 = arith.extui %0 : i1 to i32
    %c0_i32_0 = arith.constant 0 : i32
    %2 = arith.cmpi ne, %1, %c0_i32_0 : i32
    scf.if %2 {
      %cst_14 = arith.constant 0.000000e+00 : f32
      %21 = vector.broadcast %cst_14 : f32 to vector<16x256xf32>
      %c0_15 = arith.constant 0 : index
      %c0_16 = arith.constant 0 : index
      %22 = vector.load %arg7[%c0_15, %c0_16] : memref<16x256xf32, #tpu.memory_space<vmem>>, vector<16x256xf32>
      tpu.vector_store %arg7[%c0_15, %c0_16], %21 {strides = array<i32>} : memref<16x256xf32, #tpu.memory_space<vmem>>, vector<16x256xf32>,
    } else {
    }
    %c0 = arith.constant 0 : index
    %c0_1 = arith.constant 0 : index
    %c0_2 = arith.constant 0 : index
    %3 = vector.load %arg4[%c0, %c0_1, %c0_2] : memref<1x512x256xi8, #tpu.memory_space<vmem>>, vector<1x512x256xi8>
    %4 = vector.shape_cast %3 : vector<1x512x256xi8> to vector<512x256xi8>
    %5 = arith.sitofp %4 : vector<512x256xi8> to vector<512x256xbf16>
    %c0_3 = arith.constant 0 : index
    %c0_4 = arith.constant 0 : index
    %c0_5 = arith.constant 0 : index
    %6 = vector.load %arg5[%c0_3, %c0_4, %c0_5] : memref<1x8x256xbf16, #tpu.memory_space<vmem>>, vector<1x8x256xbf16>
    %7 = vector.shape_cast %6 : vector<1x8x256xbf16> to vector<8x256xbf16>
    %8 = vector.shape_cast %5 : vector<512x256xbf16> to vector<8x64x256xbf16>
    %9 = vector.shape_cast %7 : vector<8x256xbf16> to vector<8x1x256xbf16>
    %10 = vector.broadcast %9 : vector<8x1x256xbf16> to vector<8x64x256xbf16>
    %11 = arith.mulf %8, %10 : vector<8x64x256xbf16>
    %12 = vector.shape_cast %11 : vector<8x64x256xbf16> to vector<512x256xbf16>
    %c0_6 = arith.constant 0 : index
    %c0_7 = arith.constant 0 : index
    %13 = vector.load %arg7[%c0_6, %c0_7] : memref<16x256xf32, #tpu.memory_space<vmem>>, vector<16x256xf32>
    %c0_8 = arith.constant 0 : index
    %c0_9 = arith.constant 0 : index
    %14 = vector.load %arg3[%c0_8, %c0_9] : memref<16x512xbf16, #tpu.memory_space<vmem>>, vector<16x512xbf16>
    %cst = arith.constant dense<0.000000e+00> : vector<16x256xf32>
    %15 = tpu.matmul %14, %12, %cst {dimension_numbers = #tpu.dot_dimension_numbers<[1], [0], [0], [1], [0, 0, 1, 1], [], []>} : vector<16x512xbf16>, vector<512x256xbf16>, vector<16x256xf32> -> vector<16x256xf32>
    %16 = arith.addf %13, %15 : vector<16x256xf32>
    %c0_10 = arith.constant 0 : index
    %c0_11 = arith.constant 0 : index
    %17 = vector.load %arg7[%c0_10, %c0_11] : memref<16x256xf32, #tpu.memory_space<vmem>>, vector<16x256xf32>
    tpu.vector_store %arg7[%c0_10, %c0_11], %16 {strides = array<i32>} : memref<16x256xf32, #tpu.memory_space<vmem>>, vector<16x256xf32>,
    %c0_i32_12 = arith.constant 0 : i32
    %18 = arith.cmpi eq, %arg2, %c0_i32_12 : i32
    %19 = arith.extui %18 : i1 to i32
    %c0_i32_13 = arith.constant 0 : i32
    %20 = arith.cmpi ne, %19, %c0_i32_13 : i32
    scf.if %20 {
      %c0_14 = arith.constant 0 : index
      %c0_15 = arith.constant 0 : index
      %21 = vector.load %arg7[%c0_14, %c0_15] : memref<16x256xf32, #tpu.memory_space<vmem>>, vector<16x256xf32>
      %22 = arith.truncf %21 : vector<16x256xf32> to vector<16x256xbf16>
      %c0_16 = arith.constant 0 : index
      %c0_17 = arith.constant 0 : index
      %23 = vector.load %arg6[%c0_16, %c0_17] : memref<16x256xbf16, #tpu.memory_space<vmem>>, vector<16x256xbf16>
      tpu.vector_store %arg6[%c0_16, %c0_17], %22 {strides = array<i32>} : memref<16x256xbf16, #tpu.memory_space<vmem>>, vector<16x256xbf16>,
    } else {
    }
    return
  }
  func.func @transform_0(%arg0: i32, %arg1: i32, %arg2: i32) -> (i32, i32) {
    %c0_i32 = arith.constant 0 : i32
    return %arg1, %arg2 : i32, i32
  }
  func.func @transform_1(%arg0: i32, %arg1: i32, %arg2: i32) -> (i32, i32, i32) {
    %c0_i32 = arith.constant 0 : i32
    %c0_i32_0 = arith.constant 0 : i32
    return %arg0, %arg2, %c0_i32 : i32, i32, i32
  }
  func.func @transform_2(%arg0: i32, %arg1: i32, %arg2: i32) -> (i32, i32, i32) {
    %c0_i32 = arith.constant 0 : i32
    %c0_i32_0 = arith.constant 0 : i32
    return %arg0, %arg2, %c0_i32 : i32, i32, i32
  }
  func.func @transform_3(%arg0: i32, %arg1: i32, %arg2: i32) -> (i32, i32) {
    %c0_i32 = arith.constant 0 : i32
    return %arg1, %arg0 : i32, i32
  }
}

</mosaic_0001>

<llo_original>
// kernel: marlin_3bit_matmul.1
$region0: #{marlin_3bit_matmul.1}
  #allocation0 [shape = 'u32[]', space=smem, size = 0x4, offset = 0x4, fixed_abs, tag = 'smem constant byte address 0x4 - core index']
  #allocation1 [shape = 'u32[144,128]{1,0:T(1,128)}', space=vmem, size = 0x12000, scoped, tag = 'internal scratch']
  #allocation2 [shape = 'f32[16,256]{1,0:T(8,128)}', space=vmem, size = 0x4000, scoped, tag = 'scratch operand']
  %s0 = inlined_call_operand.hbm [shape: bf16[16,512], index: 0, kind: input, shape index: {}]
  %s1 = inlined_call_operand.hbm [shape: s8[1,512,256], index: 1, kind: input, shape index: {}]
  %s2 = inlined_call_operand.hbm [shape: bf16[1,8,256], index: 2, kind: input, shape index: {}]
  %s3 = inlined_call_operand.hbm [shape: bf16[16,256], index: 3, kind: output, shape index: {}]
  %s4 = sld [smem:[#allocation0]]
  $region42: #{marlin_3bit_matmul.1} parent=0
    _
  %s6 = ssub.s32 1, %s4
  %s7 = scalar_select 0, %s6, %s4
  $region1: #{marlin_3bit_matmul.1} parent=0
    #allocation3 [shape = 'u8[16384]{0}', space=vmem, size = 0x4000, scoped, tag = 'input window, operand 0, single buffered']
    #allocation4 [shape = 's32[1]{0}', space=sflag, size = 0x4, scoped, tag = 'scoped memory for marlin_3bit_matmul.1']
    #allocation5 [shape = 's32[1]{0}', space=sflag, size = 0x4, scoped, tag = 'scoped memory for marlin_3bit_matmul.1']
    #allocation6 [shape = 'u8[131072]{0}', space=vmem, size = 0x20000, scoped, tag = 'input window, operand 1, single buffered']
    #allocation7 [shape = 's32[1]{0}', space=sflag, size = 0x4, scoped, tag = 'scoped memory for marlin_3bit_matmul.1']
    #allocation8 [shape = 'u8[4096]{0}', space=vmem, size = 0x1000, scoped, tag = 'input window, operand 2, single buffered']
    #allocation9 [shape = 'u8[8192]{0}', space=vmem, size = 0x2000, scoped, tag = 'output window, operand 0, single buffered']
    %8 = vsyncpa [#allocation4], 0
    %9 = vsyncpa [#allocation7], 0
    %10 = vsyncpa [#allocation5], 0
    // Predicated region
    $region2: #{marlin_3bit_matmul.1} parent=1 // pred_check
      _
    $region3: #{marlin_3bit_matmul.1} parent=1 // pred_check_branch
      %12 = sbr.rel (0) target = $region5
    $region4: #{marlin_3bit_matmul.1} parent=1 // pred_region
      %s14 = ssub.s32 512, 512
      %15 = vsyncadd [#allocation4], %s14
      %s16 = sshll.u32 [#allocation3], 4
      %s17 = int_to_ptr.vmem [resolvable:$true] %s16
      %22 = dma.hbm_to_vmem [thread:$0]  %s0, 512, %s17, [#allocation4], 256, 256, 16
    $region5: #{marlin_3bit_matmul.1} parent=1 // pred_fallthru
      _
    // Predicated region
    $region6: #{marlin_3bit_matmul.1} parent=1 // pred_check
      _
    $region7: #{marlin_3bit_matmul.1} parent=1 // pred_check_branch
      %24 = sbr.rel (0) target = $region9
    $region8: #{marlin_3bit_matmul.1} parent=1 // pred_region
      %s26 = ssub.s32 4096, 4096
      %27 = vsyncadd [#allocation7], %s26
      %s28 = sshll.u32 [#allocation6], 4
      %s29 = int_to_ptr.vmem [resolvable:$true] %s28
      %34 = dma.hbm_to_vmem [thread:$0]  %s1, 4096, %s29, [#allocation7], 256, 256, 16
    $region9: #{marlin_3bit_matmul.1} parent=1 // pred_fallthru
      _
    // Predicated region
    $region10: #{marlin_3bit_matmul.1} parent=1 // pred_check
      _
    $region11: #{marlin_3bit_matmul.1} parent=1 // pred_check_branch
      %36 = sbr.rel (0) target = $region13
    $region12: #{marlin_3bit_matmul.1} parent=1 // pred_region
      %s38 = ssub.s32 128, 128
      %39 = vsyncadd [#allocation7], %s38
      %s41 = sshll.u32 [#allocation8], 4
      %s42 = int_to_ptr.vmem [resolvable:$true] %s41
      %44 = dma.hbm_to_vmem [thread:$0]  %s2, 128, %s42, [#allocation7]
    $region13: #{marlin_3bit_matmul.1} parent=1 // pred_fallthru
      _
    // Predicated region
    $region14: #{marlin_3bit_matmul.1} parent=1 // pred_check
      _
    $region15: #{marlin_3bit_matmul.1} parent=1 // pred_check_branch
      %46 = sbr.rel (0) target = $region17
    $region16: #{marlin_3bit_matmul.1} parent=1 // pred_region
      %47 = dma.done [#allocation4], 512
    $region17: #{marlin_3bit_matmul.1} parent=1 // pred_fallthru
      _
    // Predicated region
    $region18: #{marlin_3bit_matmul.1} parent=1 // pred_check
      _
    $region19: #{marlin_3bit_matmul.1} parent=1 // pred_check_branch
      %49 = sbr.rel (0) target = $region21
    $region20: #{marlin_3bit_matmul.1} parent=1 // pred_region
      %50 = dma.done [#allocation7], 4096
    $region21: #{marlin_3bit_matmul.1} parent=1 // pred_fallthru
      _
    // Predicated region
    $region22: #{marlin_3bit_matmul.1} parent=1 // pred_check
      _
    $region23: #{marlin_3bit_matmul.1} parent=1 // pred_check_branch
      %52 = sbr.rel (0) target = $region25
    $region24: #{marlin_3bit_matmul.1} parent=1 // pred_region
      %53 = dma.done [#allocation7], 128
    $region25: #{marlin_3bit_matmul.1} parent=1 // pred_fallthru
      _
    %p54 = scmp.eq.s32.totalorder 0, 0
    // Predicated region
    $region26: #{marlin_3bit_matmul.1} parent=1 // pred_check
      %p55 = pneg %p54
    $region27: #{marlin_3bit_matmul.1} parent=1 // pred_check_branch
      %57 = sbr.rel (%p55) target = $region29
    $region28: #{marlin_3bit_matmul.1} parent=1 // pred_region
      %58 = vst [vmem:[#allocation2] sm:$0xff] 0.0
      %59 = vst [vmem:[#allocation2 + $0x8] sm:$0xff] 0.0
      %60 = vst [vmem:[#allocation2 + $0x10] sm:$0xff] 0.0
      %61 = vst [vmem:[#allocation2 + $0x18] sm:$0xff] 0.0
    $region29: #{marlin_3bit_matmul.1} parent=1 // pred_fallthru
      _
    %v62 = vld [vmem:[#allocation6] sm:$0xff]
    %v63 = vld [vmem:[#allocation6 + $0x8] sm:$0xff]
    %v64 = vld [vmem:[#allocation6 + $0x10] sm:$0xff]
    %v65 = vld [vmem:[#allocation6 + $0x18] sm:$0xff]
    %v66 = vld [vmem:[#allocation6 + $0x20] sm:$0xff]
    %v67 = vld [vmem:[#allocation6 + $0x28] sm:$0xff]
    %v68 = vld [vmem:[#allocation6 + $0x30] sm:$0xff]
    %v69 = vld [vmem:[#allocation6 + $0x38] sm:$0xff]
    %v70 = vld [vmem:[#allocation6 + $0x40] sm:$0xff]
    %v71 = vld [vmem:[#allocation6 + $0x48] sm:$0xff]
    %v72 = vld [vmem:[#allocation6 + $0x50] sm:$0xff]
    %v73 = vld [vmem:[#allocation6 + $0x58] sm:$0xff]
    %v74 = vld [vmem:[#allocation6 + $0x60] sm:$0xff]
    %v75 = vld [vmem:[#allocation6 + $0x68] sm:$0xff]
    %v76 = vld [vmem:[#allocation6 + $0x70] sm:$0xff]
    %v77 = vld [vmem:[#allocation6 + $0x78] sm:$0xff]
    %v78 = vld [vmem:[#allocation6 + $0x80] sm:$0xff]
    %v79 = vld [vmem:[#allocation6 + $0x88] sm:$0xff]
    %v80 = vld [vmem:[#allocation6 + $0x90] sm:$0xff]
    %v81 = vld [vmem:[#allocation6 + $0x98] sm:$0xff]
    %v82 = vld [vmem:[#allocation6 + $0xa0] sm:$0xff]
    %v83 = vld [vmem:[#allocation6 + $0xa8] sm:$0xff]
    %v84 = vld [vmem:[#allocation6 + $0xb0] sm:$0xff]
    %v85 = vld [vmem:[#allocation6 + $0xb8] sm:$0xff]
    %v86 = vld [vmem:[#allocation6 + $0xc0] sm:$0xff]
    %v87 = vld [vmem:[#allocation6 + $0xc8] sm:$0xff]
    %v88 = vld [vmem:[#allocation6 + $0xd0] sm:$0xff]
    %v89 = vld [vmem:[#allocation6 + $0xd8] sm:$0xff]
    %v90 = vld [vmem:[#allocation6 + $0xe0] sm:$0xff]
    %v91 = vld [vmem:[#allocation6 + $0xe8] sm:$0xff]
    %v92 = vld [vmem:[#allocation6 + $0xf0] sm:$0xff]
    %v93 = vld [vmem:[#allocation6 + $0xf8] sm:$0xff]
    %v94 = vunpack.c.l.s8.bf16 %v62
    %v95 = vunpack.c.l.s8.bf16 %v63
    %v96 = vunpack.c.h.s8.bf16 %v62
    %v97 = vunpack.c.h.s8.bf16 %v63
    %v98 = vunpack.c.l.s8.bf16 %v64
    %v99 = vunpack.c.l.s8.bf16 %v65
    %v100 = vunpack.c.h.s8.bf16 %v64
    %v101 = vunpack.c.h.s8.bf16 %v65
    %v102 = vunpack.c.l.s8.bf16 %v66
    %v103 = vunpack.c.l.s8.bf16 %v67
    %v104 = vunpack.c.h.s8.bf16 %v66
    %v105 = vunpack.c.h.s8.bf16 %v67
    %v106 = vunpack.c.l.s8.bf16 %v68
    %v107 = vunpack.c.l.s8.bf16 %v69
    %v108 = vunpack.c.h.s8.bf16 %v68
    %v109 = vunpack.c.h.s8.bf16 %v69
    %v110 = vunpack.c.l.s8.bf16 %v70
    %v111 = vunpack.c.l.s8.bf16 %v71
    %v112 = vunpack.c.h.s8.bf16 %v70
    %v113 = vunpack.c.h.s8.bf16 %v71
    %v114 = vunpack.c.l.s8.bf16 %v72
    %v115 = vunpack.c.l.s8.bf16 %v73
    %v116 = vunpack.c.h.s8.bf16 %v72
    %v117 = vunpack.c.h.s8.bf16 %v73
    %v118 = vunpack.c.l.s8.bf16 %v74
    %v119 = vunpack.c.l.s8.bf16 %v75
    %v120 = vunpack.c.h.s8.bf16 %v74
    %v121 = vunpack.c.h.s8.bf16 %v75
    %v122 = vunpack.c.l.s8.bf16 %v76
    %v123 = vunpack.c.l.s8.bf16 %v77
    %v124 = vunpack.c.h.s8.bf16 %v76
    %v125 = vunpack.c.h.s8.bf16 %v77
    %v126 = vunpack.c.l.s8.bf16 %v78
    %v127 = vunpack.c.l.s8.bf16 %v79
    %v128 = vunpack.c.h.s8.bf16 %v78
    %v129 = vunpack.c.h.s8.bf16 %v79
    %v130 = vunpack.c.l.s8.bf16 %v80
    %v131 = vunpack.c.l.s8.bf16 %v81
    %v132 = vunpack.c.h.s8.bf16 %v80
    %v133 = vunpack.c.h.s8.bf16 %v81
    %v134 = vunpack.c.l.s8.bf16 %v82
    %v135 = vunpack.c.l.s8.bf16 %v83
    %v136 = vunpack.c.h.s8.bf16 %v82
    %v137 = vunpack.c.h.s8.bf16 %v83
    %v138 = vunpack.c.l.s8.bf16 %v84
    %v139 = vunpack.c.l.s8.bf16 %v85
    %v140 = vunpack.c.h.s8.bf16 %v84
    %v141 = vunpack.c.h.s8.bf16 %v85
    %v142 = vunpack.c.l.s8.bf16 %v86
    %v143 = vunpack.c.l.s8.bf16 %v87
    %v144 = vunpack.c.h.s8.bf16 %v86
    %v145 = vunpack.c.h.s8.bf16 %v87
    %v146 = vunpack.c.l.s8.bf16 %v88
    %v147 = vunpack.c.l.s8.bf16 %v89
    %v148 = vunpack.c.h.s8.bf16 %v88
    %v149 = vunpack.c.h.s8.bf16 %v89
    %v150 = vunpack.c.l.s8.bf16 %v90
    %v151 = vunpack.c.l.s8.bf16 %v91
    %v152 = vunpack.c.h.s8.bf16 %v90
    %v153 = vunpack.c.h.s8.bf16 %v91
    %v154 = vunpack.c.l.s8.bf16 %v92
    %v155 = vunpack.c.l.s8.bf16 %v93
    %v156 = vunpack.c.h.s8.bf16 %v92
    %v157 = vunpack.c.h.s8.bf16 %v93
    %v158 = vld [vmem:[#allocation8] sm:$0xff]
    %v161 = vunpack.c.l.s4 1966171168
    %v162 = vunpack.c.0.s8 %v161
    %v163 = vlaneseq
    %v164 = vshrl.u32 %v163, 7
    %v165 = vsub.s32 %v162, %v164
    %v166 = vrot.slane %v158, %v165
    %v167 = vcombine.high %v166, %v166
    %v169 = vunpack.c.l.s4 1966171168
    %v170 = vunpack.c.0.s8 %v169
    %v171 = vlaneseq
    %v172 = vshrl.u32 %v171, 7
    %v173 = vsub.s32 %v170, %v172
    %v174 = vrot.slane %v166, %v173
    %v176 = vunpack.c.l.s4 1966171168
    %v177 = vunpack.c.0.s8 %v176
    %v178 = vlaneseq
    %v179 = vshrl.u32 %v178, 7
    %v180 = vsub.s32 %v177, %v179
    %v181 = vrot.slane %v167, %v180
    %v182 = vcombine.high %v174, %v174
    %v183 = vcombine.high %v181, %v181
    %v184 = vunpack.i.l.s16 %v174
    %v185 = vunpack.i.h.s16 %v174
    %v186 = vunpack.i.l.s16 %v181
    %v187 = vunpack.i.h.s16 %v181
    %v188 = vunpack.i.l.s16 %v182
    %v189 = vunpack.i.h.s16 %v182
    %v190 = vunpack.i.l.s16 %v183
    %v191 = vunpack.i.h.s16 %v183
    %v192 = vpack.i.b16 %v184, %v184
    %v193 = vpack.i.b16 %v185, %v185
    %v194 = vpack.i.b16 %v186, %v186
    %v195 = vpack.i.b16 %v187, %v187
    %v196 = vpack.i.b16 %v188, %v188
    %v197 = vpack.i.b16 %v189, %v189
    %v198 = vpack.i.b16 %v190, %v190
    %v199 = vpack.i.b16 %v191, %v191
    %v200 = vlaneseq
    %v201 = vshrl.u32 %v200, 7
    %v202 = vsub.s32 0, %v201
    %v203 = vrot.slane %v192, %v202
    %v204 = vlaneseq
    %v205 = vshrl.u32 %v204, 7
    %v206 = vsub.s32 1, %v205
    %v207 = vrot.slane %v192, %v206
    %v208 = vlaneseq
    %v209 = vshrl.u32 %v208, 7
    %v210 = vsub.s32 0, %v209
    %v211 = vrot.slane %v193, %v210
    %v212 = vlaneseq
    %v213 = vshrl.u32 %v212, 7
    %v214 = vsub.s32 1, %v213
    %v215 = vrot.slane %v193, %v214
    %v216 = vlaneseq
    %v217 = vshrl.u32 %v216, 7
    %v218 = vsub.s32 0, %v217
    %v219 = vrot.slane %v194, %v218
    %v220 = vlaneseq
    %v221 = vshrl.u32 %v220, 7
    %v222 = vsub.s32 1, %v221
    %v223 = vrot.slane %v194, %v222
    %v224 = vlaneseq
    %v225 = vshrl.u32 %v224, 7
    %v226 = vsub.s32 0, %v225
    %v227 = vrot.slane %v195, %v226
    %v228 = vlaneseq
    %v229 = vshrl.u32 %v228, 7
    %v230 = vsub.s32 1, %v229
    %v231 = vrot.slane %v195, %v230
    %v232 = vlaneseq
    %v233 = vshrl.u32 %v232, 7
    %v234 = vsub.s32 0, %v233
    %v235 = vrot.slane %v196, %v234
    %v236 = vlaneseq
    %v237 = vshrl.u32 %v236, 7
    %v238 = vsub.s32 1, %v237
    %v239 = vrot.slane %v196, %v238
    %v240 = vlaneseq
    %v241 = vshrl.u32 %v240, 7
    %v242 = vsub.s32 0, %v241
    %v243 = vrot.slane %v197, %v242
    %v244 = vlaneseq
    %v245 = vshrl.u32 %v244, 7
    %v246 = vsub.s32 1, %v245
    %v247 = vrot.slane %v197, %v246
    %v248 = vlaneseq
    %v249 = vshrl.u32 %v248, 7
    %v250 = vsub.s32 0, %v249
    %v251 = vrot.slane %v198, %v250
    %v252 = vlaneseq
    %v253 = vshrl.u32 %v252, 7
    %v254 = vsub.s32 1, %v253
    %v255 = vrot.slane %v198, %v254
    %v256 = vlaneseq
    %v257 = vshrl.u32 %v256, 7
    %v258 = vsub.s32 0, %v257
    %v259 = vrot.slane %v199, %v258
    %v260 = vlaneseq
    %v261 = vshrl.u32 %v260, 7
    %v262 = vsub.s32 1, %v261
    %v263 = vrot.slane %v199, %v262
    %v265 = vpack.i.b16 %v203, %v203
    %v267 = vlaneseq
    %v268 = vshrl.u32 %v267, 7
    %v269 = vsub.s32 0, %v268
    %v270 = vrot.slane %v265, %v269
    %v272 = vpack.i.b16 %v207, %v207
    %v274 = vlaneseq
    %v275 = vshrl.u32 %v274, 7
    %v276 = vsub.s32 0, %v275
    %v277 = vrot.slane %v272, %v276
    %v279 = vpack.i.b16 %v211, %v211
    %v281 = vlaneseq
    %v282 = vshrl.u32 %v281, 7
    %v283 = vsub.s32 0, %v282
    %v284 = vrot.slane %v279, %v283
    %v286 = vpack.i.b16 %v215, %v215
    %v288 = vlaneseq
    %v289 = vshrl.u32 %v288, 7
    %v290 = vsub.s32 0, %v289
    %v291 = vrot.slane %v286, %v290
    %v293 = vpack.i.b16 %v219, %v219
    %v295 = vlaneseq
    %v296 = vshrl.u32 %v295, 7
    %v297 = vsub.s32 0, %v296
    %v298 = vrot.slane %v293, %v297
    %v300 = vpack.i.b16 %v223, %v223
    %v302 = vlaneseq
    %v303 = vshrl.u32 %v302, 7
    %v304 = vsub.s32 0, %v303
    %v305 = vrot.slane %v300, %v304
    %v307 = vpack.i.b16 %v227, %v227
    %v309 = vlaneseq
    %v310 = vshrl.u32 %v309, 7
    %v311 = vsub.s32 0, %v310
    %v312 = vrot.slane %v307, %v311
    %v314 = vpack.i.b16 %v231, %v231
    %v316 = vlaneseq
    %v317 = vshrl.u32 %v316, 7
    %v318 = vsub.s32 0, %v317
    %v319 = vrot.slane %v314, %v318
    %v321 = vpack.i.b16 %v235, %v235
    %v323 = vlaneseq
    %v324 = vshrl.u32 %v323, 7
    %v325 = vsub.s32 0, %v324
    %v326 = vrot.slane %v321, %v325
    %v328 = vpack.i.b16 %v239, %v239
    %v330 = vlaneseq
    %v331 = vshrl.u32 %v330, 7
    %v332 = vsub.s32 0, %v331
    %v333 = vrot.slane %v328, %v332
    %v335 = vpack.i.b16 %v243, %v243
    %v337 = vlaneseq
    %v338 = vshrl.u32 %v337, 7
    %v339 = vsub.s32 0, %v338
    %v340 = vrot.slane %v335, %v339
    %v342 = vpack.i.b16 %v247, %v247
    %v344 = vlaneseq
    %v345 = vshrl.u32 %v344, 7
    %v346 = vsub.s32 0, %v345
    %v347 = vrot.slane %v342, %v346
    %v349 = vpack.i.b16 %v251, %v251
    %v351 = vlaneseq
    %v352 = vshrl.u32 %v351, 7
    %v353 = vsub.s32 0, %v352
    %v354 = vrot.slane %v349, %v353
    %v356 = vpack.i.b16 %v255, %v255
    %v358 = vlaneseq
    %v359 = vshrl.u32 %v358, 7
    %v360 = vsub.s32 0, %v359
    %v361 = vrot.slane %v356, %v360
    %v363 = vpack.i.b16 %v259, %v259
    %v365 = vlaneseq
    %v366 = vshrl.u32 %v365, 7
    %v367 = vsub.s32 0, %v366
    %v368 = vrot.slane %v363, %v367
    %v370 = vpack.i.b16 %v263, %v263
    %v372 = vlaneseq
    %v373 = vshrl.u32 %v372, 7
    %v374 = vsub.s32 0, %v373
    %v375 = vrot.slane %v370, %v374
    %v376 = vmul.bf16 %v94, %v270
    %v377 = vmul.bf16 %v95, %v277
    %v378 = vmul.bf16 %v96, %v270
    %v379 = vmul.bf16 %v97, %v277
    %v380 = vmul.bf16 %v98, %v270
    %v381 = vmul.bf16 %v99, %v277
    %v382 = vmul.bf16 %v100, %v270
    %v383 = vmul.bf16 %v101, %v277
    %v384 = vmul.bf16 %v102, %v284
    %v385 = vmul.bf16 %v103, %v291
    %v386 = vmul.bf16 %v104, %v284
    %v387 = vmul.bf16 %v105, %v291
    %v388 = vmul.bf16 %v106, %v284
    %v389 = vmul.bf16 %v107, %v291
    %v390 = vmul.bf16 %v108, %v284
    %v391 = vmul.bf16 %v109, %v291
    %v392 = vmul.bf16 %v110, %v298
    %v393 = vmul.bf16 %v111, %v305
    %v394 = vmul.bf16 %v112, %v298
    %v395 = vmul.bf16 %v113, %v305
    %v396 = vmul.bf16 %v114, %v298
    %v397 = vmul.bf16 %v115, %v305
    %v398 = vmul.bf16 %v116, %v298
    %v399 = vmul.bf16 %v117, %v305
    %v400 = vmul.bf16 %v118, %v312
    %v401 = vmul.bf16 %v119, %v319
    %v402 = vmul.bf16 %v120, %v312
    %v403 = vmul.bf16 %v121, %v319
    %v404 = vmul.bf16 %v122, %v312
    %v405 = vmul.bf16 %v123, %v319
    %v406 = vmul.bf16 %v124, %v312
    %v407 = vmul.bf16 %v125, %v319
    %v408 = vmul.bf16 %v126, %v326
    %v409 = vmul.bf16 %v127, %v333
    %v410 = vmul.bf16 %v128, %v326
    %v411 = vmul.bf16 %v129, %v333
    %v412 = vmul.bf16 %v130, %v326
    %v413 = vmul.bf16 %v131, %v333
    %v414 = vmul.bf16 %v132, %v326
    %v415 = vmul.bf16 %v133, %v333
    %v416 = vmul.bf16 %v134, %v340
    %v417 = vmul.bf16 %v135, %v347
    %v418 = vmul.bf16 %v136, %v340
    %v419 = vmul.bf16 %v137, %v347
    %v420 = vmul.bf16 %v138, %v340
    %v421 = vmul.bf16 %v139, %v347
    %v422 = vmul.bf16 %v140, %v340
    %v423 = vmul.bf16 %v141, %v347
    %v424 = vmul.bf16 %v142, %v354
    %v425 = vmul.bf16 %v143, %v361
    %v426 = vmul.bf16 %v144, %v354
    %v427 = vmul.bf16 %v145, %v361
    %v428 = vmul.bf16 %v146, %v354
    %v429 = vmul.bf16 %v147, %v361
    %v430 = vmul.bf16 %v148, %v354
    %v431 = vmul.bf16 %v149, %v361
    %v432 = vmul.bf16 %v150, %v368
    %v433 = vmul.bf16 %v151, %v375
    %v434 = vmul.bf16 %v152, %v368
    %v435 = vmul.bf16 %v153, %v375
    %v436 = vmul.bf16 %v154, %v368
    %v437 = vmul.bf16 %v155, %v375
    %v438 = vmul.bf16 %v156, %v368
    %v439 = vmul.bf16 %v157, %v375
    %v440 = vld [vmem:[#allocation2] sm:$0xff]
    %v441 = vld [vmem:[#allocation2 + $0x8] sm:$0xff]
    %v442 = vld [vmem:[#allocation2 + $0x10] sm:$0xff]
    %v443 = vld [vmem:[#allocation2 + $0x18] sm:$0xff]
    %v444 = vld [vmem:[#allocation3] sm:$0xff]
    %v445 = vld [vmem:[#allocation3 + $0x8] sm:$0xff]
    %v446 = vld [vmem:[#allocation3 + $0x10] sm:$0xff]
    %v447 = vld [vmem:[#allocation3 + $0x18] sm:$0xff]
    %v452 = vunpack.c.l.b16 %v444
    %v453 = vunpack.c.h.b16 %v444
    %v454 = vunpack.c.l.b16 %v445
    %v455 = vunpack.c.h.b16 %v445
    %v456 = vunpack.c.l.b16 %v446
    %v457 = vunpack.c.h.b16 %v446
    %v458 = vunpack.c.l.b16 %v447
    %v459 = vunpack.c.h.b16 %v447
    %v460 = vpack.c.b16 %v456, %v452
    %v461 = vpack.c.b16 %v457, %v453
    %v462 = vpack.c.b16 %v458, %v454
    %v463 = vpack.c.b16 %v459, %v455
    %468 = vmatprep.subr.bf16.mxu0 %v377
    %469 = vmatpush1.bf16.msra.mxu0 %v376
    %470 = vmatprep.subr.bf16.mxu0 %v379
    %471 = vmatpush1.bf16.msra.mxu0 %v378
    %472 = vmatprep.subr.bf16.mxu0 %v381
    %473 = vmatpush1.bf16.msra.mxu0 %v380
    %474 = vmatprep.subr.bf16.mxu0 %v383
    %475 = vmatpush1.bf16.msra.mxu0 %v382
    %476 = vmatprep.subr.bf16.mxu0 %v385
    %477 = vmatpush1.bf16.msra.mxu0 %v384
    %478 = vmatprep.subr.bf16.mxu0 %v387
    %479 = vmatpush1.bf16.msra.mxu0 %v386
    %480 = vmatprep.subr.bf16.mxu0 %v389
    %481 = vmatpush1.bf16.msra.mxu0 %v388
    %482 = vmatprep.subr.bf16.mxu0 %v391
    %483 = vmatpush1.bf16.msra.mxu0 %v390
    %484 = vmatprep.subr.bf16.mxu0 %v393
    %485 = vmatpush1.bf16.msra.mxu0 %v392
    %486 = vmatprep.subr.bf16.mxu0 %v395
    %487 = vmatpush1.bf16.msra.mxu0 %v394
    %488 = vmatprep.subr.bf16.mxu0 %v397
    %489 = vmatpush1.bf16.msra.mxu0 %v396
    %490 = vmatprep.subr.bf16.mxu0 %v399
    %491 = vmatpush1.bf16.msra.mxu0 %v398
    %492 = vmatprep.subr.bf16.mxu0 %v401
    %493 = vmatpush1.bf16.msra.mxu0 %v400
    %494 = vmatprep.subr.bf16.mxu0 %v403
    %495 = vmatpush1.bf16.msra.mxu0 %v402
    %496 = vmatprep.subr.bf16.mxu0 %v405
    %497 = vmatpush1.bf16.msra.mxu0 %v404
    %498 = vmatprep.subr.bf16.mxu0 %v407
    %499 = vmatpush1.bf16.msra.mxu0 %v406
    %500 = vmatprep.mubr.bf16.mxu0 %v461
    %501 = vmatmul.mubr.bf16.gmra.mrb[0].mxu0 %v460
    %v502 = vpop.f32.mrb[0].mxu0
    %v503 = vadd.f32 0.0, %v502
    %v504 = vpop.f32.mrb[0].mxu0
    %v505 = vadd.f32 0.0, %v504
    %v506 = vpop.f32.mrb[0].mxu0
    %v507 = vadd.f32 0.0, %v506
    %v508 = vpop.f32.mrb[0].mxu0
    %v509 = vadd.f32 0.0, %v508
    %510 = vdwg.mxu0
    %511 = vmatprep.subr.bf16.mxu0 %v409
    %512 = vmatpush1.bf16.msra.mxu0 %v408
    %513 = vmatprep.subr.bf16.mxu0 %v411
    %514 = vmatpush1.bf16.msra.mxu0 %v410
    %515 = vmatprep.subr.bf16.mxu0 %v413
    %516 = vmatpush1.bf16.msra.mxu0 %v412
    %517 = vmatprep.subr.bf16.mxu0 %v415
    %518 = vmatpush1.bf16.msra.mxu0 %v414
    %519 = vmatprep.subr.bf16.mxu0 %v417
    %520 = vmatpush1.bf16.msra.mxu0 %v416
    %521 = vmatprep.subr.bf16.mxu0 %v419
    %522 = vmatpush1.bf16.msra.mxu0 %v418
    %523 = vmatprep.subr.bf16.mxu0 %v421
    %524 = vmatpush1.bf16.msra.mxu0 %v420
    %525 = vmatprep.subr.bf16.mxu0 %v423
    %526 = vmatpush1.bf16.msra.mxu0 %v422
    %527 = vmatprep.subr.bf16.mxu0 %v425
    %528 = vmatpush1.bf16.msra.mxu0 %v424
    %529 = vmatprep.subr.bf16.mxu0 %v427
    %530 = vmatpush1.bf16.msra.mxu0 %v426
    %531 = vmatprep.subr.bf16.mxu0 %v429
    %532 = vmatpush1.bf16.msra.mxu0 %v428
    %533 = vmatprep.subr.bf16.mxu0 %v431
    %534 = vmatpush1.bf16.msra.mxu0 %v430
    %535 = vmatprep.subr.bf16.mxu0 %v433
    %536 = vmatpush1.bf16.msra.mxu0 %v432
    %537 = vmatprep.subr.bf16.mxu0 %v435
    %538 = vmatpush1.bf16.msra.mxu0 %v434
    %539 = vmatprep.subr.bf16.mxu0 %v437
    %540 = vmatpush1.bf16.msra.mxu0 %v436
    %541 = vmatprep.subr.bf16.mxu0 %v439
    %542 = vmatpush1.bf16.msra.mxu0 %v438
    %543 = vmatprep.mubr.bf16.mxu0 %v463
    %544 = vmatmul.mubr.bf16.gmra.mrb[0].mxu0 %v462
    %v545 = vpop.f32.mrb[0].mxu0
    %v546 = vadd.f32 %v503, %v545
    %v547 = vpop.f32.mrb[0].mxu0
    %v548 = vadd.f32 %v505, %v547
    %v549 = vpop.f32.mrb[0].mxu0
    %v550 = vadd.f32 %v507, %v549
    %v551 = vpop.f32.mrb[0].mxu0
    %v552 = vadd.f32 %v509, %v551
    %553 = vdwg.mxu0
    %v554 = vadd.f32 %v440, %v546
    %v555 = vadd.f32 %v441, %v548
    %v556 = vadd.f32 %v442, %v550
    %v557 = vadd.f32 %v443, %v552
    %558 = vst [vmem:[#allocation2] sm:$0xff] %v554
    %559 = vst [vmem:[#allocation2 + $0x8] sm:$0xff] %v555
    %560 = vst [vmem:[#allocation2 + $0x10] sm:$0xff] %v556
    %561 = vst [vmem:[#allocation2 + $0x18] sm:$0xff] %v557
    // Predicated region
    $region30: #{marlin_3bit_matmul.1} parent=1 // pred_check
      %p562 = pneg %p54
    $region31: #{marlin_3bit_matmul.1} parent=1 // pred_check_branch
      %564 = sbr.rel (%p562) target = $region33
    $region32: #{marlin_3bit_matmul.1} parent=1 // pred_region
      %v565 = vld [vmem:[#allocation2] sm:$0xff]
      %v566 = vld [vmem:[#allocation2 + $0x8] sm:$0xff]
      %v567 = vld [vmem:[#allocation2 + $0x10] sm:$0xff]
      %v568 = vld [vmem:[#allocation2 + $0x18] sm:$0xff]
      %v569 = vpack.c.bf16 %v567, %v565
      %v570 = vpack.c.bf16 %v568, %v566
      %v573 = vunpack.c.l.b16 %v569
      %v574 = vunpack.c.l.b16 %v570
      %v575 = vunpack.c.h.b16 %v569
      %v576 = vunpack.c.h.b16 %v570
      %v577 = vpack.c.b16 %v574, %v573
      %v578 = vpack.c.b16 %v576, %v575
      %581 = vst [vmem:[#allocation9] sm:$0xff] %v577
      %582 = vst [vmem:[#allocation9 + $0x8] sm:$0xff] %v578
    $region33: #{marlin_3bit_matmul.1} parent=1 // pred_fallthru
      _
    // Predicated region
    $region34: #{marlin_3bit_matmul.1} parent=1 // pred_check
      _
    $region35: #{marlin_3bit_matmul.1} parent=1 // pred_check_branch
      %584 = sbr.rel (0) target = $region37
    $region36: #{marlin_3bit_matmul.1} parent=1 // pred_region
      %s586 = ssub.s32 256, 256
      %587 = vsyncadd [#allocation5], %s586
      %s588 = sshll.u32 [#allocation9], 4
      %s589 = int_to_ptr.vmem [resolvable:$true] %s588
      %594 = dma.vmem_to_hbm [thread:$0]  %s589, 256, %s3, [#allocation5], 128, 128, 8
    $region37: #{marlin_3bit_matmul.1} parent=1 // pred_fallthru
      _
    // Predicated region
    $region38: #{marlin_3bit_matmul.1} parent=1 // pred_check
      _
    $region39: #{marlin_3bit_matmul.1} parent=1 // pred_check_branch
      %596 = sbr.rel (0) target = $region41
    $region40: #{marlin_3bit_matmul.1} parent=1 // pred_region
      %597 = dma.done [#allocation5], 256
    $region41: #{marlin_3bit_matmul.1} parent=1 // pred_fallthru
      _
    %598 = vsyncpa [#allocation4], 1
    %599 = vsyncpa [#allocation7], 1
    %600 = vsyncpa [#allocation5], 1

</llo_original>
